<compile_context>
chip_gen: v5e
topology: v5e:2x2
jax: 0.10.0
libtpu: 0.0.40
codegen_flags: <defaults>
</compile_context>

<pallas_src>
import functools

import jax
import jax.numpy as jnp
import numpy as np
from jax.experimental import pallas as pl
from jax.experimental.pallas import tpu as pltpu


def _is_pow2(v):
    return v > 0 and (v & (v - 1)) == 0


def _fused_factorized_conv_kernel(*refs, width, masks_in_kernel):
    """Fused (1x3)->(3x1) conv on one batch tile.

    refs (masks_in_kernel=True):  x_ref, w1_ref, w2_ref, o_ref
    refs (masks_in_kernel=False): halo_ref, x_ref, w1_ref, w2_ref, o_ref

    x_ref:  (TB, C, HW)     input, spatial flattened, HW on lanes
    halo:   (4, HW)         {0,1} masks [has-left, has-right, has-up, has-down]
    w1_ref: (3, Bn, C)      conv1 weight, tap-major
    w2_ref: (3, Cout, Bn)   conv2 weight, tap-major
    o_ref:  (TB, Cout, HW)  stride-1 output, HW on lanes
    """
    if masks_in_kernel:
        x_ref, w1_ref, w2_ref, o_ref = refs
    else:
        halo_ref, x_ref, w1_ref, w2_ref, o_ref = refs

    tb, cin, hw = x_ref.shape
    cout = o_ref.shape[1]
    lanes = tb * hw

    # ---- halo masks as (1, TB*HW) {0,1} f32 rows -------------------------
    if masks_in_kernel:
        # Pow2 W and HW: pure bitwise/compare VPU ops, no vector int div/mod.
        lane = jax.lax.broadcasted_iota(jnp.int32, (1, lanes), 1)
        wp = lane & (width - 1)            # column index inside the image
        p = lane & (hw - 1)                # flat position inside the image
        m_l = (wp != 0).astype(jnp.float32)
        m_r = (wp != width - 1).astype(jnp.float32)
        m_u = (p >= width).astype(jnp.float32)
        m_d = (p < hw - width).astype(jnp.float32)
    else:
        halo = halo_ref[...]
        if tb > 1:
            halo = jnp.tile(halo, (1, tb))   # repeat per image along lanes
        m_l, m_r, m_u, m_d = halo[0:1], halo[1:2], halo[2:3], halo[3:4]

    # ---- fold the batch tile onto the lane axis: (TB,C,HW) -> (C,TB*HW) ---
    if tb == 1:
        x2d = x_ref[...].reshape(cin, hw).astype(jnp.float32)
    else:
        x2d = jnp.transpose(x_ref[...], (1, 0, 2)).reshape(cin, lanes)
        x2d = x2d.astype(jnp.float32)

    w1_0 = w1_ref[0].astype(jnp.float32)     # tap multiplying x[.., w-1]
    w1_1 = w1_ref[1].astype(jnp.float32)     # tap multiplying x[.., w  ]
    w1_2 = w1_ref[2].astype(jnp.float32)     # tap multiplying x[.., w+1]
    w2_0 = w2_ref[0].astype(jnp.float32)     # tap multiplying y1[.., h-1]
    w2_1 = w2_ref[1].astype(jnp.float32)
    w2_2 = w2_ref[2].astype(jnp.float32)

    # ---- conv1: 1x3 along W -- three accumulated dots, no concatenate -----
    # A one-column shift is a roll by 1 lane; the masks zero both the padded
    # border column and any wrap across image boundaries in the flat axis.
    x_l = jnp.roll(x2d, 1, axis=1) * m_l     # x[c, h, w-1]
    x_r = jnp.roll(x2d, -1, axis=1) * m_r    # x[c, h, w+1]
    y1 = (jnp.dot(w1_0, x_l, preferred_element_type=jnp.float32)
          + jnp.dot(w1_1, x2d, preferred_element_type=jnp.float32)
          + jnp.dot(w1_2, x_r, preferred_element_type=jnp.float32))  # (Bn,L)

    # ---- conv2: 3x1 along H -- a one-row shift is a roll by W lanes --------
    y_u = jnp.roll(y1, width, axis=1) * m_u  # y1[b, h-1, w]
    y_d = jnp.roll(y1, -width, axis=1) * m_d # y1[b, h+1, w]
    y2 = (jnp.dot(w2_0, y_u, preferred_element_type=jnp.float32)
          + jnp.dot(w2_1, y1, preferred_element_type=jnp.float32)
          + jnp.dot(w2_2, y_d, preferred_element_type=jnp.float32))  # (Cout,L)

    # ---- store back in (TB, Cout, HW) layout (lane-dense, unmasked) -------
    if tb == 1:
        o_ref[...] = y2.reshape(1, cout, hw).astype(o_ref.dtype)
    else:
        o_ref[...] = jnp.transpose(
            y2.reshape(cout, tb, hw), (1, 0, 2)).astype(o_ref.dtype)


def _vmem_budget():
    """Per-generation VMEM working-set budget + explicit scoped limit."""
    try:
        cap = int(pltpu.get_tpu_info().vmem_capacity_bytes)
    except Exception:  # pragma: no cover -- conservative fallback
        cap = 128 << 20
    budget = cap * 3 // 8          # ~24 MiB on v7x (64 MiB), ~48 MiB on v5e/v6e
    limit = min(cap // 2, 64 << 20)  # raise the scoped limit, leave headroom
    return budget, limit


def _pick_batch_tile(n, cin, nb, cout, hw, itemsize, budget):
    """Largest batch tile (divisor of N) whose real footprint fits the budget.

    Footprint per image: double-buffered input + output blocks plus the f32
    intermediates (shifted x slabs, y1 and its shifts, y2, masks) in VMEM.
    """
    per_image = hw * (2 * (cin + cout) * itemsize
                      + (3 * cin + 3 * nb + cout + 4) * 4)
    tb = max(1, budget // max(per_image, 1))
    if n >= 2:
        tb = min(tb, n // 2)   # >=2 grid steps so v7x's 2nd TensorCore works
    tb = min(tb, n)
    while n % tb:
        tb -= 1
    return int(tb)


def factorized_conv_forward(x_nchw, w1, w2, stride=1):
    """Forward of FactorizedConv.

    x_nchw: (N, C, H, W)
    w1:     (n_basis, C, 1, 3)            -- conv1 weight (PyTorch OIHW)
    w2:     (out_channels, n_basis, 3, 1) -- conv2 weight (PyTorch OIHW)
    Returns (N, out_channels, H_out, W_out) in NCHW.
    """
    n, cin, h, w = x_nchw.shape
    nb = w1.shape[0]
    cout = w2.shape[0]
    hw = h * w
    dt = x_nchw.dtype

    # Tap-major weight repack (tiny): w1t[k, b, c] = w1[b, c, 0, k],
    # w2t[k, o, b] = w2[o, b, k, 0] -- tap k multiplies the (w+k-1)/(h+k-1) shift.
    w1t = jnp.transpose(w1[:, :, 0, :], (2, 0, 1))   # (3, Bn, C)
    w2t = jnp.transpose(w2[:, :, :, 0], (2, 0, 1))   # (3, Cout, Bn)

    xf = x_nchw.reshape(n, cin, hw)                  # free NCHW -> NC(HW) view

    budget, vmem_limit = _vmem_budget()
    tb = _pick_batch_tile(n, cin, nb, cout, hw, dt.itemsize, budget)

    masks_in_kernel = _is_pow2(w) and _is_pow2(hw)
    kernel = functools.partial(_fused_factorized_conv_kernel, width=w,
                               masks_in_kernel=masks_in_kernel)

    in_specs = [
        pl.BlockSpec((tb, cin, hw), lambda i: (i, 0, 0)),
        pl.BlockSpec((3, nb, cin), lambda i: (0, 0, 0)),
        pl.BlockSpec((3, cout, nb), lambda i: (0, 0, 0)),
    ]
    operands = [xf, w1t, w2t]
    if not masks_in_kernel:
        # Fallback for non-power-of-two spatial dims: a tiny (4, HW) {0,1}
        # halo-mask operand (avoids vector int div/mod inside the kernel).
        wpos = np.arange(hw, dtype=np.int64) % w
        hpos = np.arange(hw, dtype=np.int64) // w
        halo = np.stack([wpos != 0, wpos != w - 1, hpos != 0, hpos != h - 1])
        in_specs.insert(0, pl.BlockSpec((4, hw), lambda i: (0, 0)))
        operands.insert(0, jnp.asarray(halo.astype(np.float32)))

    out_flat = pl.pallas_call(
        kernel,
        out_shape=jax.ShapeDtypeStruct((n, cout, hw), dt),
        grid=(n // tb,),
        in_specs=in_specs,
        out_specs=pl.BlockSpec((tb, cout, hw), lambda i: (i, 0, 0)),
        compiler_params=pltpu.CompilerParams(
            dimension_semantics=("parallel",),
            vmem_limit_bytes=int(vmem_limit)),
    )(*operands)

    out = out_flat.reshape(n, cout, h, w)
    if stride > 1:
        # A k=3 / pad=1 strided conv equals the stride-1 conv subsampled at
        # the same centers, so this slice is exact.
        # TODO(synk): fold stride>1 subsampling into the kernel's store so the
        # redundant rows/columns are never computed or written to HBM.
        out = out[:, :, ::stride, ::stride]
    return out
    # TODO(synk): add a second grid axis over H row blocks (with a 1-row halo
    # roll) for small-batch / large-spatial shapes so >=3-4 grid steps keep
    # the DMA pipeline full; TODO(synk): optional bf16 activation streaming
    # (f32 MXU accumulation) would halve HBM traffic if the model tolerates it.


def _reference_forward(x, w1, w2, stride=1):
    """Pure-JAX reference using lax.conv (matches nn.Conv2d semantics)."""
    dn = ("NCHW", "OIHW", "NCHW")
    y = jax.lax.conv_general_dilated(
        x, w1, window_strides=(1, stride), padding=((0, 0), (1, 1)),
        dimension_numbers=dn)
    y = jax.lax.conv_general_dilated(
        y, w2, window_strides=(stride, 1), padding=((1, 1), (0, 0)),
        dimension_numbers=dn)
    return y


if __name__ == "__main__":
    # Small shapes consistent with the module: batch=2, in_channels=4,
    # n_basis=6, out_channels=8, spatial=16x16, stride=1, bias=False.
    N, Cin, H, W = 2, 4, 16, 16
    n_basis, Cout, stride = 6, 8, 1

    key = jax.random.PRNGKey(0)
    kx, k1, k2 = jax.random.split(key, 3)
    x = jax.random.normal(kx, (N, Cin, H, W), dtype=jnp.float32)
    # Deterministic synthetic weights (PyTorch Conv2d OIHW shapes).
    w1 = 0.1 * jax.random.normal(k1, (n_basis, Cin, 1, 3), dtype=jnp.float32)
    w2 = 0.1 * jax.random.normal(k2, (Cout, n_basis, 3, 1), dtype=jnp.float32)

    fwd = jax.jit(functools.partial(factorized_conv_forward, stride=stride))
    out = jax.block_until_ready(fwd(x, w1, w2))

    ref = jax.block_until_ready(_reference_forward(x, w1, w2, stride))
    assert out.shape == ref.shape, (out.shape, ref.shape)
    np.testing.assert_allclose(np.asarray(out), np.asarray(ref),
                               rtol=1e-5, atol=1e-5)
    print("KERNEL_OK")
</pallas_src>

<mosaic_0001>
module attributes {stable_mosaic.version = 11 : i64} {
  func.func @_fused_factorized_conv_kernel(%arg0: i32, %arg1: memref<1x4x256xf32, #tpu.memory_space<vmem>>, %arg2: memref<3x6x4xf32, #tpu.memory_space<vmem>>, %arg3: memref<3x8x6xf32, #tpu.memory_space<vmem>>, %arg4: memref<1x8x256xf32, #tpu.memory_space<vmem>>) attributes {dimension_semantics = [#tpu.dimension_semantics<parallel>], iteration_bounds = array<i64: 2>, scalar_prefetch = 0 : i64, scratch_operands = 0 : i64, tpu.core_type = #tpu.core_type<tc>, window_params = [{transform_indices = @transform_0, window_bounds = array<i64: 1, 4, 256>}, {pipeline_mode = #tpu.pipeline_mode<synchronous>, transform_indices = @transform_1, window_bounds = array<i64: 3, 6, 4>}, {pipeline_mode = #tpu.pipeline_mode<synchronous>, transform_indices = @transform_2, window_bounds = array<i64: 3, 8, 6>}, {transform_indices = @transform_3, window_bounds = array<i64: 1, 8, 256>}]} {
    %0 = tpu.iota {dimensions = array<i32: 1>} : vector<1x256xi32>
    %c15_i32 = arith.constant 15 : i32
    %1 = vector.broadcast %c15_i32 : i32 to vector<1x256xi32>
    %2 = arith.andi %0, %1 : vector<1x256xi32>
    %c255_i32 = arith.constant 255 : i32
    %3 = vector.broadcast %c255_i32 : i32 to vector<1x256xi32>
    %4 = arith.andi %0, %3 : vector<1x256xi32>
    %c0_i32 = arith.constant 0 : i32
    %5 = vector.broadcast %c0_i32 : i32 to vector<1x256xi32>
    %6 = arith.cmpi ne, %2, %5 : vector<1x256xi32>
    %7 = arith.extui %6 : vector<1x256xi1> to vector<1x256xi32>
    %8 = arith.sitofp %7 : vector<1x256xi32> to vector<1x256xf32>
    %c15_i32_0 = arith.constant 15 : i32
    %9 = vector.broadcast %c15_i32_0 : i32 to vector<1x256xi32>
    %10 = arith.cmpi ne, %2, %9 : vector<1x256xi32>
    %11 = arith.extui %10 : vector<1x256xi1> to vector<1x256xi32>
    %12 = arith.sitofp %11 : vector<1x256xi32> to vector<1x256xf32>
    %c16_i32 = arith.constant 16 : i32
    %13 = vector.broadcast %c16_i32 : i32 to vector<1x256xi32>
    %14 = arith.cmpi sge, %4, %13 : vector<1x256xi32>
    %15 = arith.extui %14 : vector<1x256xi1> to vector<1x256xi32>
    %16 = arith.sitofp %15 : vector<1x256xi32> to vector<1x256xf32>
    %c240_i32 = arith.constant 240 : i32
    %17 = vector.broadcast %c240_i32 : i32 to vector<1x256xi32>
    %18 = arith.cmpi slt, %4, %17 : vector<1x256xi32>
    %19 = arith.extui %18 : vector<1x256xi1> to vector<1x256xi32>
    %20 = arith.sitofp %19 : vector<1x256xi32> to vector<1x256xf32>
    %c0 = arith.constant 0 : index
    %c0_1 = arith.constant 0 : index
    %c0_2 = arith.constant 0 : index
    %21 = vector.load %arg1[%c0, %c0_1, %c0_2] : memref<1x4x256xf32, #tpu.memory_space<vmem>>, vector<1x4x256xf32>
    %22 = vector.shape_cast %21 : vector<1x4x256xf32> to vector<4x256xf32>
    %c0_3 = arith.constant 0 : index
    %c0_4 = arith.constant 0 : index
    %c0_5 = arith.constant 0 : index
    %23 = vector.load %arg2[%c0_3, %c0_4, %c0_5] : memref<3x6x4xf32, #tpu.memory_space<vmem>>, vector<1x6x4xf32>
    %24 = vector.shape_cast %23 : vector<1x6x4xf32> to vector<6x4xf32>
    %c1 = arith.constant 1 : index
    %c0_6 = arith.constant 0 : index
    %c0_7 = arith.constant 0 : index
    %25 = vector.load %arg2[%c1, %c0_6, %c0_7] : memref<3x6x4xf32, #tpu.memory_space<vmem>>, vector<1x6x4xf32>
    %26 = vector.shape_cast %25 : vector<1x6x4xf32> to vector<6x4xf32>
    %c2 = arith.constant 2 : index
    %c0_8 = arith.constant 0 : index
    %c0_9 = arith.constant 0 : index
    %27 = vector.load %arg2[%c2, %c0_8, %c0_9] : memref<3x6x4xf32, #tpu.memory_space<vmem>>, vector<1x6x4xf32>
    %28 = vector.shape_cast %27 : vector<1x6x4xf32> to vector<6x4xf32>
    %c0_10 = arith.constant 0 : index
    %c0_11 = arith.constant 0 : index
    %c0_12 = arith.constant 0 : index
    %29 = vector.load %arg3[%c0_10, %c0_11, %c0_12] : memref<3x8x6xf32, #tpu.memory_space<vmem>>, vector<1x8x6xf32>
    %30 = vector.shape_cast %29 : vector<1x8x6xf32> to vector<8x6xf32>
    %c1_13 = arith.constant 1 : index
    %c0_14 = arith.constant 0 : index
    %c0_15 = arith.constant 0 : index
    %31 = vector.load %arg3[%c1_13, %c0_14, %c0_15] : memref<3x8x6xf32, #tpu.memory_space<vmem>>, vector<1x8x6xf32>
    %32 = vector.shape_cast %31 : vector<1x8x6xf32> to vector<8x6xf32>
    %c2_16 = arith.constant 2 : index
    %c0_17 = arith.constant 0 : index
    %c0_18 = arith.constant 0 : index
    %33 = vector.load %arg3[%c2_16, %c0_17, %c0_18] : memref<3x8x6xf32, #tpu.memory_space<vmem>>, vector<1x8x6xf32>
    %34 = vector.shape_cast %33 : vector<1x8x6xf32> to vector<8x6xf32>
    %35 = vector.extract_strided_slice %22 {offsets = [0, 255], sizes = [4, 1], strides = [1, 1]} : vector<4x256xf32> to vector<4x1xf32>
    %36 = vector.extract_strided_slice %22 {offsets = [0, 0], sizes = [4, 255], strides = [1, 1]} : vector<4x256xf32> to vector<4x255xf32>
    %37 = tpu.concatenate %35, %36 in 1 : vector<4x1xf32>, vector<4x255xf32> -> vector<4x256xf32>
    %38 = vector.broadcast %8 : vector<1x256xf32> to vector<4x256xf32>
    %39 = arith.mulf %37, %38 : vector<4x256xf32>
    %40 = vector.extract_strided_slice %22 {offsets = [0, 1], sizes = [4, 255], strides = [1, 1]} : vector<4x256xf32> to vector<4x255xf32>
    %41 = vector.extract_strided_slice %22 {offsets = [0, 0], sizes = [4, 1], strides = [1, 1]} : vector<4x256xf32> to vector<4x1xf32>
    %42 = tpu.concatenate %40, %41 in 1 : vector<4x255xf32>, vector<4x1xf32> -> vector<4x256xf32>
    %43 = vector.broadcast %12 : vector<1x256xf32> to vector<4x256xf32>
    %44 = arith.mulf %42, %43 : vector<4x256xf32>
    %cst = arith.constant dense<0.000000e+00> : vector<6x256xf32>
    %45 = tpu.matmul %24, %39, %cst {dimension_numbers = #tpu.dot_dimension_numbers<[1], [0], [0], [1], [0, 0, 1, 1], [], []>} : vector<6x4xf32>, vector<4x256xf32>, vector<6x256xf32> -> vector<6x256xf32>
    %cst_19 = arith.constant dense<0.000000e+00> : vector<6x256xf32>
    %46 = tpu.matmul %26, %22, %cst_19 {dimension_numbers = #tpu.dot_dimension_numbers<[1], [0], [0], [1], [0, 0, 1, 1], [], []>} : vector<6x4xf32>, vector<4x256xf32>, vector<6x256xf32> -> vector<6x256xf32>
    %47 = arith.addf %45, %46 : vector<6x256xf32>
    %cst_20 = arith.constant dense<0.000000e+00> : vector<6x256xf32>
    %48 = tpu.matmul %28, %44, %cst_20 {dimension_numbers = #tpu.dot_dimension_numbers<[1], [0], [0], [1], [0, 0, 1, 1], [], []>} : vector<6x4xf32>, vector<4x256xf32>, vector<6x256xf32> -> vector<6x256xf32>
    %49 = arith.addf %47, %48 : vector<6x256xf32>
    %50 = vector.extract_strided_slice %49 {offsets = [0, 240], sizes = [6, 16], strides = [1, 1]} : vector<6x256xf32> to vector<6x16xf32>
    %51 = vector.extract_strided_slice %49 {offsets = [0, 0], sizes = [6, 240], strides = [1, 1]} : vector<6x256xf32> to vector<6x240xf32>
    %52 = tpu.concatenate %50, %51 in 1 : vector<6x16xf32>, vector<6x240xf32> -> vector<6x256xf32>
    %53 = vector.broadcast %16 : vector<1x256xf32> to vector<6x256xf32>
    %54 = arith.mulf %52, %53 : vector<6x256xf32>
    %55 = vector.extract_strided_slice %49 {offsets = [0, 16], sizes = [6, 240], strides = [1, 1]} : vector<6x256xf32> to vector<6x240xf32>
    %56 = vector.extract_strided_slice %49 {offsets = [0, 0], sizes = [6, 16], strides = [1, 1]} : vector<6x256xf32> to vector<6x16xf32>
    %57 = tpu.concatenate %55, %56 in 1 : vector<6x240xf32>, vector<6x16xf32> -> vector<6x256xf32>
    %58 = vector.broadcast %20 : vector<1x256xf32> to vector<6x256xf32>
    %59 = arith.mulf %57, %58 : vector<6x256xf32>
    %cst_21 = arith.constant dense<0.000000e+00> : vector<8x256xf32>
    %60 = tpu.matmul %30, %54, %cst_21 {dimension_numbers = #tpu.dot_dimension_numbers<[1], [0], [0], [1], [0, 0, 1, 1], [], []>} : vector<8x6xf32>, vector<6x256xf32>, vector<8x256xf32> -> vector<8x256xf32>
    %cst_22 = arith.constant dense<0.000000e+00> : vector<8x256xf32>
    %61 = tpu.matmul %32, %49, %cst_22 {dimension_numbers = #tpu.dot_dimension_numbers<[1], [0], [0], [1], [0, 0, 1, 1], [], []>} : vector<8x6xf32>, vector<6x256xf32>, vector<8x256xf32> -> vector<8x256xf32>
    %62 = arith.addf %60, %61 : vector<8x256xf32>
    %cst_23 = arith.constant dense<0.000000e+00> : vector<8x256xf32>
    %63 = tpu.matmul %34, %59, %cst_23 {dimension_numbers = #tpu.dot_dimension_numbers<[1], [0], [0], [1], [0, 0, 1, 1], [], []>} : vector<8x6xf32>, vector<6x256xf32>, vector<8x256xf32> -> vector<8x256xf32>
    %64 = arith.addf %62, %63 : vector<8x256xf32>
    %65 = vector.shape_cast %64 : vector<8x256xf32> to vector<1x8x256xf32>
    %c0_24 = arith.constant 0 : index
    %c0_25 = arith.constant 0 : index
    %c0_26 = arith.constant 0 : index
    %66 = vector.load %arg4[%c0_24, %c0_25, %c0_26] : memref<1x8x256xf32, #tpu.memory_space<vmem>>, vector<1x8x256xf32>
    tpu.vector_store %arg4[%c0_24, %c0_25, %c0_26], %65 {strides = array<i32>} : memref<1x8x256xf32, #tpu.memory_space<vmem>>, vector<1x8x256xf32>,
    return
  }
  func.func @transform_0(%arg0: i32) -> (i32, i32, i32) {
    %c0_i32 = arith.constant 0 : i32
    %c0_i32_0 = arith.constant 0 : i32
    %c0_i32_1 = arith.constant 0 : i32
    return %arg0, %c0_i32, %c0_i32_0 : i32, i32, i32
  }
  func.func @transform_1(%arg0: i32) -> (i32, i32, i32) {
    %c0_i32 = arith.constant 0 : i32
    %c0_i32_0 = arith.constant 0 : i32
    %c0_i32_1 = arith.constant 0 : i32
    %c0_i32_2 = arith.constant 0 : i32
    return %c0_i32, %c0_i32_0, %c0_i32_1 : i32, i32, i32
  }
  func.func @transform_2(%arg0: i32) -> (i32, i32, i32) {
    %c0_i32 = arith.constant 0 : i32
    %c0_i32_0 = arith.constant 0 : i32
    %c0_i32_1 = arith.constant 0 : i32
    %c0_i32_2 = arith.constant 0 : i32
    return %c0_i32, %c0_i32_0, %c0_i32_1 : i32, i32, i32
  }
  func.func @transform_3(%arg0: i32) -> (i32, i32, i32) {
    %c0_i32 = arith.constant 0 : i32
    %c0_i32_0 = arith.constant 0 : i32
    %c0_i32_1 = arith.constant 0 : i32
    return %arg0, %c0_i32, %c0_i32_0 : i32, i32, i32
  }
}

</mosaic_0001>

<llo_original>
// kernel: factorized_conv_forward.1
$region0: #{factorized_conv_forward.1}
  #allocation0 [shape = 'u32[]', space=smem, size = 0x4, offset = 0x4, fixed_abs, tag = 'smem constant byte address 0x4 - core index']
  #allocation1 [shape = 'u32[72,128]{1,0:T(1,128)}', space=vmem, size = 0x9000, scoped, tag = 'internal scratch']
  %s0 = inlined_call_operand.vmem [shape: f32[2,4,256], index: 0, kind: input, shape index: {}]
  %s1 = inlined_call_operand.vmem [shape: f32[3,6,4], index: 1, kind: input, shape index: {}]
  %s2 = inlined_call_operand.vmem [shape: f32[3,8,6], index: 2, kind: input, shape index: {}]
  %s3 = inlined_call_operand.vmem [shape: f32[2,8,256], index: 3, kind: output, shape index: {}]
  %s4 = sld [smem:[#allocation0]]
  $region45: #{factorized_conv_forward.1} parent=0
    _
  %s6 = ssub.s32 1, %s4
  %s7 = scalar_select 0, %s6, %s4
  loop: start=0, step=1, limit=4
  $region2: #{factorized_conv_forward.1} parent=0 // loop_pre_header
    _
  $region3: #{factorized_conv_forward.1} parent=0 // loop_header
    %s9 = sphi 0, %s13
    %p10 = scmp.ge.s32.totalorder %s9, 4
    %s19 = sphi 0, %s21
    %s22 = sphi 0, %s19
    %s23 = sphi 0, %s22
    %s39 = sphi 0, %s23
    %s43 = sphi 0, %s43
    %s45 = sphi 0, %s43
    %s46 = sphi 0, %s45
    %s60 = sphi 0, %s46
    %s64 = sphi 0, %s64
    %s66 = sphi 0, %s64
    %s67 = sphi 0, %s66
    %s81 = sphi 0, %s67
    %s87 = sphi 0, %s89
    %s90 = sphi 0, %s87
    %s91 = sphi 0, %s90
    %s107 = sphi 0, %s91
  $region4: #{factorized_conv_forward.1} parent=0 // loop_header_branch
    %12 = sbr.rel (%p10) target = $region8
  $region5: #{factorized_conv_forward.1} parent=0 // loop_body
    %s14 = ssub.s32 %s9, 1
    %s15 = ssub.s32 %s9, 2
    %s16 = sadd.s32 %s9, 1
    %s17 = ssub.s32 %s9, %s16
    %p18 = scmp.eq.s32.totalorder %s17, 0
    %s20 = sadd.s32 %s19, 1
    %s21 = scalar_select %p18, %s19, %s20
    %p24 = pneg %p18
    %p25 = scmp.eq.s32.totalorder %s9, 1
    %p26 = por %p24, %p25
    %p27 = scmp.ne.s32.totalorder %s19, %s22
    %p28 = scmp.eq.s32.totalorder %s9, 0
    %p29 = por %p27, %p28
    %p30 = scmp.ne.s32.totalorder %s19, %s22
    %p31 = scmp.eq.s32.totalorder %s14, 1
    %p32 = por %p30, %p31
    %p33 = scmp.ne.s32.totalorder %s22, %s23
    %p34 = scmp.eq.s32.totalorder %s14, 0
    %p35 = por %p33, %p34
    %p36 = scmp.ne.s32.totalorder %s22, %s23
    %p37 = scmp.eq.s32.totalorder %s15, 1
    %p38 = por %p36, %p37
    %p40 = scmp.ne.s32.totalorder %s23, %s39
    %p41 = scmp.eq.s32.totalorder %s15, 0
    %p42 = por %p40, %p41
    %s44 = sadd.s32 %s43, 1
    %p47 = scmp.eq.s32.totalorder %s9, 1
    %p48 = scmp.ne.s32.totalorder %s43, %s45
    %p49 = scmp.eq.s32.totalorder %s9, 0
    %p50 = por %p48, %p49
    %p51 = scmp.ne.s32.totalorder %s43, %s45
    %p52 = scmp.eq.s32.totalorder %s14, 1
    %p53 = por %p51, %p52
    %p54 = scmp.ne.s32.totalorder %s45, %s46
    %p55 = scmp.eq.s32.totalorder %s14, 0
    %p56 = por %p54, %p55
    %p57 = scmp.ne.s32.totalorder %s45, %s46
    %p58 = scmp.eq.s32.totalorder %s15, 1
    %p59 = por %p57, %p58
    %p61 = scmp.ne.s32.totalorder %s46, %s60
    %p62 = scmp.eq.s32.totalorder %s15, 0
    %p63 = por %p61, %p62
    %s65 = sadd.s32 %s64, 1
    %p68 = scmp.eq.s32.totalorder %s9, 1
    %p69 = scmp.ne.s32.totalorder %s64, %s66
    %p70 = scmp.eq.s32.totalorder %s9, 0
    %p71 = por %p69, %p70
    %p72 = scmp.ne.s32.totalorder %s64, %s66
    %p73 = scmp.eq.s32.totalorder %s14, 1
    %p74 = por %p72, %p73
    %p75 = scmp.ne.s32.totalorder %s66, %s67
    %p76 = scmp.eq.s32.totalorder %s14, 0
    %p77 = por %p75, %p76
    %p78 = scmp.ne.s32.totalorder %s66, %s67
    %p79 = scmp.eq.s32.totalorder %s15, 1
    %p80 = por %p78, %p79
    %p82 = scmp.ne.s32.totalorder %s67, %s81
    %p83 = scmp.eq.s32.totalorder %s15, 0
    %p84 = por %p82, %p83
    %s85 = ssub.s32 %s9, %s16
    %p86 = scmp.eq.s32.totalorder %s85, 0
    %s88 = sadd.s32 %s87, 1
    %s89 = scalar_select %p86, %s87, %s88
    %p92 = pneg %p86
    %p93 = scmp.eq.s32.totalorder %s9, 1
    %p94 = por %p92, %p93
    %p95 = scmp.ne.s32.totalorder %s87, %s90
    %p96 = scmp.eq.s32.totalorder %s9, 0
    %p97 = por %p95, %p96
    %p98 = scmp.ne.s32.totalorder %s87, %s90
    %p99 = scmp.eq.s32.totalorder %s14, 1
    %p100 = por %p98, %p99
    %p101 = scmp.ne.s32.totalorder %s90, %s91
    %p102 = scmp.eq.s32.totalorder %s14, 0
    %p103 = por %p101, %p102
    %p104 = scmp.ne.s32.totalorder %s90, %s91
    %p105 = scmp.eq.s32.totalorder %s15, 1
    %p106 = por %p104, %p105
    %p108 = scmp.ne.s32.totalorder %s91, %s107
    %p109 = scmp.eq.s32.totalorder %s15, 0
    %p110 = por %p108, %p109
    %p111 = scmp.le.s32.totalorder 1, %s9
    %p112 = scmp.lt.s32.totalorder %s9, 3
    %p113 = pnand %p111, %p112
    %p114 = pneg %p113
    // Predicated region
    $region9: #{factorized_conv_forward.1} parent=5 // pred_check
      _
    $region10: #{factorized_conv_forward.1} parent=5 // pred_check_branch
      %116 = sbr.rel (%p113) target = $region12
    $region11: #{factorized_conv_forward.1} parent=5 // pred_region
      %s117 = ssub.s32 %s9, 1
      // Predicated region
      $region13: #{factorized_conv_forward.1} parent=11 // pred_check
        %p118 = pneg %p56
      $region14: #{factorized_conv_forward.1} parent=11 // pred_check_branch
        %120 = sbr.rel (%p118) target = $region16
      $region15: #{factorized_conv_forward.1} parent=11 // pred_region
        _
      $region16: #{factorized_conv_forward.1} parent=11 // pred_fallthru
        _
      // Predicated region
      $region17: #{factorized_conv_forward.1} parent=11 // pred_check
        %p121 = pneg %p77
      $region18: #{factorized_conv_forward.1} parent=11 // pred_check_branch
        %123 = sbr.rel (%p121) target = $region20
      $region19: #{factorized_conv_forward.1} parent=11 // pred_region
        _
      $region20: #{factorized_conv_forward.1} parent=11 // pred_fallthru
        _
    $region12: #{factorized_conv_forward.1} parent=5 // pred_fallthru
      _
    %p124 = scmp.lt.s32.totalorder %s9, 2
    // Predicated region
    $region21: #{factorized_conv_forward.1} parent=5 // pred_check
      %p125 = pneg %p124
    $region22: #{factorized_conv_forward.1} parent=5 // pred_check_branch
      %127 = sbr.rel (%p125) target = $region24
    $region23: #{factorized_conv_forward.1} parent=5 // pred_region
      // Predicated region
      $region25: #{factorized_conv_forward.1} parent=23 // pred_check
        %p128 = pneg %p29
      $region26: #{factorized_conv_forward.1} parent=23 // pred_check_branch
        %130 = sbr.rel (%p128) target = $region28
      $region27: #{factorized_conv_forward.1} parent=23 // pred_region
        %p131 = scmp.lt.s32.totalorder %s9, 1
        %s132 = scalar_select %p131, %s9, 1
        %s133 = smul.addr %s132, 2
        %s134 = smul.addr %s133, 4
        %s135 = scalar_lea.vmem %s0, %s134
      $region28: #{factorized_conv_forward.1} parent=23 // pred_fallthru
        _
    $region24: #{factorized_conv_forward.1} parent=5 // pred_fallthru
      _
    %p136 = scmp.le.s32.totalorder 1, %s9
    %p137 = scmp.lt.s32.totalorder %s9, 3
    %p138 = pnand %p136, %p137
    %p139 = pneg %p138
    // Predicated region
    $region29: #{factorized_conv_forward.1} parent=5 // pred_check
      _
    $region30: #{factorized_conv_forward.1} parent=5 // pred_check_branch
      %141 = sbr.rel (%p138) target = $region32
    $region31: #{factorized_conv_forward.1} parent=5 // pred_region
      %s142 = ssub.s32 %s9, 1
      %p143 = scmp.lt.s32.totalorder %s14, 1
      %s144 = scalar_select %p143, %s14, 1
      %s145 = smul.addr %s144, 2
      %s146 = smul.addr %s145, 4
      %s147 = scalar_lea.vmem %s0, %s146
      %p148 = pneg %p35
      %p149 = pneg %p32
      %p150 = pneg %p56
      %p151 = pneg %p53
      %p152 = pneg %p77
      %p153 = pneg %p74
      %p154 = pneg %p103
      %p155 = pneg %p100
      %p156 = scmp.lt.s32.totalorder %s14, 1
      %s157 = scalar_select %p156, %s14, 1
      %s158 = smul.addr %s157, 2
      %s159 = smul.addr %s158, 8
      %s160 = scalar_lea.vmem %s3, %s159
      %p161 = scmp.lt.s32.totalorder %s14, 1
      %s162 = scalar_select %p161, %s14, 1
      %s163 = smul.addr %s162, 2
      %s164 = smul.addr %s163, 4
      %s165 = scalar_lea.vmem %s0, %s164
      %p166 = scmp.lt.s32.totalorder %s14, 1
      %s167 = scalar_select %p166, %s14, 1
      %s168 = smul.addr %s167, 2
      %s169 = smul.addr %s168, 8
      %s170 = scalar_lea.vmem %s3, %s169
      %v171 = vlaneseq
      %v172 = vand.u32 %v171, 127
      %v173 = vadd.s32 %v172, 128
      %v174 = vand.u32 %v172, 15
      %v175 = vand.u32 %v173, 15
      %v176 = vand.u32 %v172, 255
      %v177 = vand.u32 %v173, 255
      %vm178 = vcmp.ne.s32.totalorder %v174, 0
      %vm179 = vcmp.ne.s32.totalorder %v175, 0
      %v180 = vsel %vm178, 1, 0
      %v181 = vsel %vm179, 1, 0
      %v182 = vcvt.s32.f32 %v180
      %v183 = vcvt.s32.f32 %v181
      %vm184 = vcmp.ne.s32.totalorder %v174, 15
      %vm185 = vcmp.ne.s32.totalorder %v175, 15
      %v186 = vsel %vm184, 1, 0
      %v187 = vsel %vm185, 1, 0
      %v188 = vcvt.s32.f32 %v186
      %v189 = vcvt.s32.f32 %v187
      %vm190 = vcmp.ge.s32.totalorder %v176, 16
      %vm191 = vcmp.ge.s32.totalorder %v177, 16
      %v192 = vsel %vm190, 1, 0
      %v193 = vsel %vm191, 1, 0
      %v194 = vcvt.s32.f32 %v192
      %v195 = vcvt.s32.f32 %v193
      %vm196 = vcmp.lt.s32.totalorder %v176, 240
      %vm197 = vcmp.lt.s32.totalorder %v177, 240
      %v198 = vsel %vm196, 1, 0
      %v199 = vsel %vm197, 1, 0
      %v200 = vcvt.s32.f32 %v198
      %v201 = vcvt.s32.f32 %v199
      %v202 = vld [vmem:[%s165] sm:$0xff]
      %v203 = vld [vmem:[%s1] sm:$0x3f]
      %s204 = scalar_lea.vmem %s1, 8
      %v205 = vld [vmem:[%s204] sm:$0x3f]
      %s206 = scalar_lea.vmem %s1, 16
      %v207 = vld [vmem:[%s206] sm:$0x3f]
      %v208 = vld [vmem:[%s2] sm:$0xff]
      %s209 = scalar_lea.vmem %s2, 8
      %v210 = vld [vmem:[%s209] sm:$0xff]
      %s211 = scalar_lea.vmem %s2, 16
      %v212 = vld [vmem:[%s211] sm:$0xff]
      %214 = vst [vmem:[#allocation1] ss:$2 sm:$0xff] %v202
      %v215 = vld.sshfl [vmem:[#allocation1 + $0x8] sm:$0xff pattern:$0x75316420]
      %216 = vrot.lane.b32.xlu0 %v215, 1
      %v217 = vpop.permute.xlu0 %216
      %219 = vst [vmem:[#allocation1] ss:$2 sm:$0xff] %v202
      %v220 = vld.sshfl [vmem:[#allocation1] sm:$0xff pattern:$0x75316420]
      %v221 = vld.sshfl [vmem:[#allocation1 + $0x8] sm:$0xff pattern:$0x75316420]
      %222 = vrot.lane.b32.xlu0 %v220, 1
      %v223 = vpop.permute.xlu0 %222
      %224 = vrot.lane.b32.xlu0 %v221, 1
      %v225 = vpop.permute.xlu0 %224
      %vm226 = vcmask 7168
      %v227 = vsel %vm226, %v223, %v225
      %v230 = vsel %vm226, %v217, %v223
      %v231 = vmul.f32 %v230, %v182
      %v232 = vmul.f32 %v227, %v183
      %233 = vst [vmem:[#allocation1] ss:$2 sm:$0xff] %v202
      %v234 = vld.sshfl [vmem:[#allocation1] sm:$0xff pattern:$0x75316420]
      %v235 = vld.sshfl [vmem:[#allocation1 + $0x8] sm:$0xff pattern:$0x75316420]
      %236 = vrot.lane.b32.xlu0 %v234, 127
      %v237 = vpop.permute.xlu0 %236
      %238 = vrot.lane.b32.xlu0 %v235, 127
      %v239 = vpop.permute.xlu0 %238
      %vm240 = vcmask 1039360
      %v241 = vsel %vm240, %v237, %v239
      %244 = vst [vmem:[#allocation1] ss:$2 sm:$0xff] %v202
      %v245 = vld.sshfl [vmem:[#allocation1] sm:$0xff pattern:$0x75316420]
      %246 = vrot.lane.b32.xlu0 %v245, 127
      %v247 = vpop.permute.xlu0 %246
      %v249 = vsel %vm240, %v239, %v247
      %v250 = vmul.f32 %v241, %v188
      %v251 = vmul.f32 %v249, %v189
      %252 = vst [vmem:[#allocation1] ss:$2 sm:$0xff] %v202
      %v253 = vld.sshfl [vmem:[#allocation1] sm:$0xff pattern:$0x75316420]
      %v254 = vld.sshfl [vmem:[#allocation1 + $0x8] sm:$0xff pattern:$0x75316420]
      %vm255 = vcmask 31744
      %v257 = vsel %vm255, %v205, 0
      %vm259 = vcmask 1043456
      %v260 = vsel %vm259, %v253, 0
      %v262 = vsel %vm259, %v254, 0
      %264 = vmatpush.msra.mxu0 0.0
      %265 = vmatpush.msra.mxu0 0.0
      %266 = vmatpush.msra.mxu0 0.0
      %267 = vmatpush.msra.mxu0 0.0
      %268 = vmatpush.msra.mxu0 0.0
      %269 = vmatpush.msra.mxu0 0.0
      %270 = vmatpush.msra.mxu0 0.0
      %271 = vmatpush.msra.mxu0 0.0
      %272 = vmatpush.msra.mxu0 0.0
      %273 = vmatpush.msra.mxu0 0.0
      %274 = vmatpush.msra.mxu0 0.0
      %275 = vmatpush.msra.mxu0 0.0
      %276 = vmatpush.msra.mxu0 0.0
      %277 = vmatpush.msra.mxu0 0.0
      %278 = vmatpush.msra.mxu0 0.0
      %279 = vmatpush.msra.mxu0 %v260
      %280 = vmatmul.f32.gmra.mxu0 %v257
      %v281 = vpop.f32.mrf.mxu0
      %v282 = vadd.f32 0.0, %v281
      %283 = vdwg.mxu0
      %284 = vmatpush.msra.mxu0 0.0
      %285 = vmatpush.msra.mxu0 0.0
      %286 = vmatpush.msra.mxu0 0.0
      %287 = vmatpush.msra.mxu0 0.0
      %288 = vmatpush.msra.mxu0 0.0
      %289 = vmatpush.msra.mxu0 0.0
      %290 = vmatpush.msra.mxu0 0.0
      %291 = vmatpush.msra.mxu0 0.0
      %292 = vmatpush.msra.mxu0 0.0
      %293 = vmatpush.msra.mxu0 0.0
      %294 = vmatpush.msra.mxu0 0.0
      %295 = vmatpush.msra.mxu0 0.0
      %296 = vmatpush.msra.mxu0 0.0
      %297 = vmatpush.msra.mxu0 0.0
      %298 = vmatpush.msra.mxu0 0.0
      %299 = vmatpush.msra.mxu0 %v262
      %300 = vmatmul.f32.gmra.mxu0 %v257
      %v301 = vpop.f32.mrf.mxu0
      %v302 = vadd.f32 0.0, %v301
      %303 = vdwg.mxu0
      %v305 = vsel %vm255, %v203, 0
      %v308 = vsel %vm259, %v231, 0
      %v311 = vsel %vm259, %v232, 0
      %313 = vmatpush.msra.mxu0 0.0
      %314 = vmatpush.msra.mxu0 0.0
      %315 = vmatpush.msra.mxu0 0.0
      %316 = vmatpush.msra.mxu0 0.0
      %317 = vmatpush.msra.mxu0 0.0
      %318 = vmatpush.msra.mxu0 0.0
      %319 = vmatpush.msra.mxu0 0.0
      %320 = vmatpush.msra.mxu0 0.0
      %321 = vmatpush.msra.mxu0 0.0
      %322 = vmatpush.msra.mxu0 0.0
      %323 = vmatpush.msra.mxu0 0.0
      %324 = vmatpush.msra.mxu0 0.0
      %325 = vmatpush.msra.mxu0 0.0
      %326 = vmatpush.msra.mxu0 0.0
      %327 = vmatpush.msra.mxu0 0.0
      %328 = vmatpush.msra.mxu0 %v308
      %329 = vmatmul.f32.gmra.mxu0 %v305
      %v330 = vpop.f32.mrf.mxu0
      %v331 = vadd.f32 %v282, %v330
      %332 = vdwg.mxu0
      %333 = vmatpush.msra.mxu0 0.0
      %334 = vmatpush.msra.mxu0 0.0
      %335 = vmatpush.msra.mxu0 0.0
      %336 = vmatpush.msra.mxu0 0.0
      %337 = vmatpush.msra.mxu0 0.0
      %338 = vmatpush.msra.mxu0 0.0
      %339 = vmatpush.msra.mxu0 0.0
      %340 = vmatpush.msra.mxu0 0.0
      %341 = vmatpush.msra.mxu0 0.0
      %342 = vmatpush.msra.mxu0 0.0
      %343 = vmatpush.msra.mxu0 0.0
      %344 = vmatpush.msra.mxu0 0.0
      %345 = vmatpush.msra.mxu0 0.0
      %346 = vmatpush.msra.mxu0 0.0
      %347 = vmatpush.msra.mxu0 0.0
      %348 = vmatpush.msra.mxu0 %v311
      %349 = vmatmul.f32.gmra.mxu0 %v305
      %v350 = vpop.f32.mrf.mxu0
      %v351 = vadd.f32 %v302, %v350
      %352 = vdwg.mxu0
      %v354 = vsel %vm255, %v207, 0
      %v357 = vsel %vm259, %v250, 0
      %v360 = vsel %vm259, %v251, 0
      %362 = vmatpush.msra.mxu0 0.0
      %363 = vmatpush.msra.mxu0 0.0
      %364 = vmatpush.msra.mxu0 0.0
      %365 = vmatpush.msra.mxu0 0.0
      %366 = vmatpush.msra.mxu0 0.0
      %367 = vmatpush.msra.mxu0 0.0
      %368 = vmatpush.msra.mxu0 0.0
      %369 = vmatpush.msra.mxu0 0.0
      %370 = vmatpush.msra.mxu0 0.0
      %371 = vmatpush.msra.mxu0 0.0
      %372 = vmatpush.msra.mxu0 0.0
      %373 = vmatpush.msra.mxu0 0.0
      %374 = vmatpush.msra.mxu0 0.0
      %375 = vmatpush.msra.mxu0 0.0
      %376 = vmatpush.msra.mxu0 0.0
      %377 = vmatpush.msra.mxu0 %v357
      %378 = vmatmul.f32.gmra.mxu0 %v354
      %v379 = vpop.f32.mrf.mxu0
      %v380 = vadd.f32 0.0, %v379
      %381 = vdwg.mxu0
      %382 = vmatpush.msra.mxu0 0.0
      %383 = vmatpush.msra.mxu0 0.0
      %384 = vmatpush.msra.mxu0 0.0
      %385 = vmatpush.msra.mxu0 0.0
      %386 = vmatpush.msra.mxu0 0.0
      %387 = vmatpush.msra.mxu0 0.0
      %388 = vmatpush.msra.mxu0 0.0
      %389 = vmatpush.msra.mxu0 0.0
      %390 = vmatpush.msra.mxu0 0.0
      %391 = vmatpush.msra.mxu0 0.0
      %392 = vmatpush.msra.mxu0 0.0
      %393 = vmatpush.msra.mxu0 0.0
      %394 = vmatpush.msra.mxu0 0.0
      %395 = vmatpush.msra.mxu0 0.0
      %396 = vmatpush.msra.mxu0 0.0
      %397 = vmatpush.msra.mxu0 %v360
      %398 = vmatmul.f32.gmra.mxu0 %v354
      %v399 = vpop.f32.mrf.mxu0
      %v400 = vadd.f32 0.0, %v399
      %401 = vdwg.mxu0
      %v402 = vadd.f32 %v331, %v380
      %v403 = vadd.f32 %v351, %v400
      %405 = vrot.lane.b32.xlu0 %v403, 16
      %v406 = vpop.permute.xlu0 %405
      %409 = vrot.lane.b32.xlu0 %v402, 16
      %v410 = vpop.permute.xlu0 %409
      %vm411 = vcmask 130048
      %v412 = vsel %vm411, %v410, %v406
      %v415 = vsel %vm411, %v406, %v410
      %v416 = vmul.f32 %v415, %v194
      %v417 = vmul.f32 %v412, %v195
      %418 = vrot.lane.b32.xlu0 %v402, 112
      %v419 = vpop.permute.xlu0 %418
      %420 = vrot.lane.b32.xlu0 %v403, 112
      %v421 = vpop.permute.xlu0 %420
      %vm422 = vcmask 916480
      %v423 = vsel %vm422, %v419, %v421
      %v427 = vsel %vm422, %v421, %v419
      %v428 = vmul.f32 %v423, %v200
      %v429 = vmul.f32 %v427, %v201
      %vm430 = vcmask 48128
      %v432 = vsel %vm430, %v210, 0
      %vm434 = vcmask 1045504
      %v435 = vsel %vm434, %v402, 0
      %v437 = vsel %vm434, %v403, 0
      %439 = vmatpush.msra.mxu0 0.0
      %440 = vmatpush.msra.mxu0 0.0
      %441 = vmatpush.msra.mxu0 0.0
      %442 = vmatpush.msra.mxu0 0.0
      %443 = vmatpush.msra.mxu0 0.0
      %444 = vmatpush.msra.mxu0 0.0
      %445 = vmatpush.msra.mxu0 0.0
      %446 = vmatpush.msra.mxu0 0.0
      %447 = vmatpush.msra.mxu0 0.0
      %448 = vmatpush.msra.mxu0 0.0
      %449 = vmatpush.msra.mxu0 0.0
      %450 = vmatpush.msra.mxu0 0.0
      %451 = vmatpush.msra.mxu0 0.0
      %452 = vmatpush.msra.mxu0 0.0
      %453 = vmatpush.msra.mxu0 0.0
      %454 = vmatpush.msra.mxu0 %v435
      %455 = vmatmul.f32.gmra.mxu0 %v432
      %v456 = vpop.f32.mrf.mxu0
      %v457 = vadd.f32 0.0, %v456
      %458 = vdwg.mxu0
      %459 = vmatpush.msra.mxu0 0.0
      %460 = vmatpush.msra.mxu0 0.0
      %461 = vmatpush.msra.mxu0 0.0
      %462 = vmatpush.msra.mxu0 0.0
      %463 = vmatpush.msra.mxu0 0.0
      %464 = vmatpush.msra.mxu0 0.0
      %465 = vmatpush.msra.mxu0 0.0
      %466 = vmatpush.msra.mxu0 0.0
      %467 = vmatpush.msra.mxu0 0.0
      %468 = vmatpush.msra.mxu0 0.0
      %469 = vmatpush.msra.mxu0 0.0
      %470 = vmatpush.msra.mxu0 0.0
      %471 = vmatpush.msra.mxu0 0.0
      %472 = vmatpush.msra.mxu0 0.0
      %473 = vmatpush.msra.mxu0 0.0
      %474 = vmatpush.msra.mxu0 %v437
      %475 = vmatmul.f32.gmra.mxu0 %v432
      %v476 = vpop.f32.mrf.mxu0
      %v477 = vadd.f32 0.0, %v476
      %478 = vdwg.mxu0
      %v480 = vsel %vm430, %v208, 0
      %v483 = vsel %vm434, %v416, 0
      %v486 = vsel %vm434, %v417, 0
      %488 = vmatpush.msra.mxu0 0.0
      %489 = vmatpush.msra.mxu0 0.0
      %490 = vmatpush.msra.mxu0 0.0
      %491 = vmatpush.msra.mxu0 0.0
      %492 = vmatpush.msra.mxu0 0.0
      %493 = vmatpush.msra.mxu0 0.0
      %494 = vmatpush.msra.mxu0 0.0
      %495 = vmatpush.msra.mxu0 0.0
      %496 = vmatpush.msra.mxu0 0.0
      %497 = vmatpush.msra.mxu0 0.0
      %498 = vmatpush.msra.mxu0 0.0
      %499 = vmatpush.msra.mxu0 0.0
      %500 = vmatpush.msra.mxu0 0.0
      %501 = vmatpush.msra.mxu0 0.0
      %502 = vmatpush.msra.mxu0 0.0
      %503 = vmatpush.msra.mxu0 %v483
      %504 = vmatmul.f32.gmra.mxu0 %v480
      %v505 = vpop.f32.mrf.mxu0
      %v506 = vadd.f32 %v457, %v505
      %507 = vdwg.mxu0
      %508 = vmatpush.msra.mxu0 0.0
      %509 = vmatpush.msra.mxu0 0.0
      %510 = vmatpush.msra.mxu0 0.0
      %511 = vmatpush.msra.mxu0 0.0
      %512 = vmatpush.msra.mxu0 0.0
      %513 = vmatpush.msra.mxu0 0.0
      %514 = vmatpush.msra.mxu0 0.0
      %515 = vmatpush.msra.mxu0 0.0
      %516 = vmatpush.msra.mxu0 0.0
      %517 = vmatpush.msra.mxu0 0.0
      %518 = vmatpush.msra.mxu0 0.0
      %519 = vmatpush.msra.mxu0 0.0
      %520 = vmatpush.msra.mxu0 0.0
      %521 = vmatpush.msra.mxu0 0.0
      %522 = vmatpush.msra.mxu0 0.0
      %523 = vmatpush.msra.mxu0 %v486
      %524 = vmatmul.f32.gmra.mxu0 %v480
      %v525 = vpop.f32.mrf.mxu0
      %v526 = vadd.f32 %v477, %v525
      %527 = vdwg.mxu0
      %v529 = vsel %vm430, %v212, 0
      %v532 = vsel %vm434, %v428, 0
      %v535 = vsel %vm434, %v429, 0
      %537 = vmatpush.msra.mxu0 0.0
      %538 = vmatpush.msra.mxu0 0.0
      %539 = vmatpush.msra.mxu0 0.0
      %540 = vmatpush.msra.mxu0 0.0
      %541 = vmatpush.msra.mxu0 0.0
      %542 = vmatpush.msra.mxu0 0.0
      %543 = vmatpush.msra.mxu0 0.0
      %544 = vmatpush.msra.mxu0 0.0
      %545 = vmatpush.msra.mxu0 0.0
      %546 = vmatpush.msra.mxu0 0.0
      %547 = vmatpush.msra.mxu0 0.0
      %548 = vmatpush.msra.mxu0 0.0
      %549 = vmatpush.msra.mxu0 0.0
      %550 = vmatpush.msra.mxu0 0.0
      %551 = vmatpush.msra.mxu0 0.0
      %552 = vmatpush.msra.mxu0 %v532
      %553 = vmatmul.f32.gmra.mxu0 %v529
      %v554 = vpop.f32.mrf.mxu0
      %v555 = vadd.f32 0.0, %v554
      %556 = vdwg.mxu0
      %557 = vmatpush.msra.mxu0 0.0
      %558 = vmatpush.msra.mxu0 0.0
      %559 = vmatpush.msra.mxu0 0.0
      %560 = vmatpush.msra.mxu0 0.0
      %561 = vmatpush.msra.mxu0 0.0
      %562 = vmatpush.msra.mxu0 0.0
      %563 = vmatpush.msra.mxu0 0.0
      %564 = vmatpush.msra.mxu0 0.0
      %565 = vmatpush.msra.mxu0 0.0
      %566 = vmatpush.msra.mxu0 0.0
      %567 = vmatpush.msra.mxu0 0.0
      %568 = vmatpush.msra.mxu0 0.0
      %569 = vmatpush.msra.mxu0 0.0
      %570 = vmatpush.msra.mxu0 0.0
      %571 = vmatpush.msra.mxu0 0.0
      %572 = vmatpush.msra.mxu0 %v535
      %573 = vmatmul.f32.gmra.mxu0 %v529
      %v574 = vpop.f32.mrf.mxu0
      %v575 = vadd.f32 0.0, %v574
      %576 = vdwg.mxu0
      %v577 = vadd.f32 %v506, %v555
      %v578 = vadd.f32 %v526, %v575
      %579 = vst [vmem:[%s170] sm:$0xff] %v577
      %580 = vst [vmem:[%s170 + $0x8] sm:$0xff] %v578
      %p581 = scmp.lt.s32.totalorder %s14, 1
      %s582 = scalar_select %p581, %s14, 1
      %s583 = smul.addr %s582, 2
      %s584 = smul.addr %s583, 8
      %s585 = scalar_lea.vmem %s3, %s584
      // Predicated region
      $region33: #{factorized_conv_forward.1} parent=31 // pred_check
        %p586 = pneg %p100
      $region34: #{factorized_conv_forward.1} parent=31 // pred_check_branch
        %588 = sbr.rel (%p586) target = $region36
      $region35: #{factorized_conv_forward.1} parent=31 // pred_region
        _
      $region36: #{factorized_conv_forward.1} parent=31 // pred_fallthru
        _
    $region32: #{factorized_conv_forward.1} parent=5 // pred_fallthru
      _
    %p589 = scmp.le.s32.totalorder 2, %s9
    // Predicated region
    $region37: #{factorized_conv_forward.1} parent=5 // pred_check
      %p590 = pneg %p589
    $region38: #{factorized_conv_forward.1} parent=5 // pred_check_branch
      %592 = sbr.rel (%p590) target = $region40
    $region39: #{factorized_conv_forward.1} parent=5 // pred_region
      %s593 = ssub.s32 %s9, 2
      // Predicated region
      $region41: #{factorized_conv_forward.1} parent=39 // pred_check
        %p594 = pneg %p106
      $region42: #{factorized_conv_forward.1} parent=39 // pred_check_branch
        %596 = sbr.rel (%p594) target = $region44
      $region43: #{factorized_conv_forward.1} parent=39 // pred_region
        %p597 = scmp.lt.s32.totalorder %s15, 1
        %s598 = scalar_select %p597, %s15, 1
        %s599 = smul.addr %s598, 2
        %s600 = smul.addr %s599, 8
        %s601 = scalar_lea.vmem %s3, %s600
      $region44: #{factorized_conv_forward.1} parent=39 // pred_fallthru
        _
    $region40: #{factorized_conv_forward.1} parent=5 // pred_fallthru
      _
  $region6: #{factorized_conv_forward.1} parent=0 // loop_footer
    %s13 = sadd.s32 1, %s9
  $region7: #{factorized_conv_forward.1} parent=0 // loop_footer_branch
    %8 = sbr.rel target = $region3
  $region8: #{factorized_conv_forward.1} parent=0 // loop_exit
    _

</llo_original>
